<compile_context>
chip_gen: v6e
topology: v6e:2x2x1
jax: 0.10.0
libtpu: 0.0.40
codegen_flags: <defaults>
</compile_context>

<pallas_src>
import math

import jax
import jax.numpy as jnp
from jax.experimental import pallas as pl
from jax.experimental.pallas import tpu as pltpu


_INV_SQRT2 = 1.0 / math.sqrt(2.0)


def _round_up(x, m):
    return ((x + m - 1) // m) * m


def _pick_row_tile(m):
    """Largest convenient row tile; full extent for small batches."""
    if m <= 256:
        return m                       # full-extent block (always legal)
    for cand in (512, 256, 128, 64, 32, 16, 8):
        if m % cand == 0:
            return cand
    return m                           # fall back to full extent


# ----------------------------------------------------------------------------
# Fused FFNN kernel: one grid step = (row tile i, layer l)
# ----------------------------------------------------------------------------
def _ffnn_kernel(x_ref, w_ref, b_ref, o_ref, act_ref):
    """x_ref  : (tm, D)  bf16  padded input rows (consumed at layer 0)
       w_ref  : (D, D)   bf16  this layer's padded weight (layer dim squeezed)
       b_ref  : (1, D)   f32   this layer's padded bias
       o_ref  : (tm, D)  f32   padded output rows (written at last layer)
       act_ref: (tm, D)  bf16  VMEM-resident activation, persists across layers
    """
    layer = pl.program_id(1)
    n_layers = pl.num_programs(1)

    @pl.when(layer == 0)
    def _():
        act_ref[...] = x_ref[...].astype(act_ref.dtype)

    # bf16 MXU matmul with f32 accumulation; bias add + GELU in f32.
    y = jnp.dot(act_ref[...], w_ref[...], preferred_element_type=jnp.float32)
    y = y + b_ref[...]

    @pl.when(layer < n_layers - 1)
    def _():
        # Exact (erf-based) GELU, matching torch.nn.GELU() default.
        g = 0.5 * y * (1.0 + jax.lax.erf(y * _INV_SQRT2))
        act_ref[...] = g.astype(act_ref.dtype)
        # TODO(synk): insert training-mode dropout mask here when needed.

    @pl.when(layer == n_layers - 1)
    def _():
        o_ref[...] = y.astype(o_ref.dtype)


# ----------------------------------------------------------------------------
# Parameter packing / wrapper
# ----------------------------------------------------------------------------
def init_ffnn_params(key, embedding_dim, hidden_dim, num_hidden_layers,
                     output_dim, dtype=jnp.float32):
    """Deterministic init mirroring the nn.Linear shapes in FFNN.
    Weights are [in_features, out_features] (transposed vs. torch Linear)."""
    params = []
    in_dim = embedding_dim
    for _ in range(num_hidden_layers):
        key, kw, kb = jax.random.split(key, 3)
        bound = 1.0 / math.sqrt(in_dim)
        w = jax.random.uniform(kw, (in_dim, hidden_dim), dtype,
                               minval=-bound, maxval=bound)
        b = jax.random.uniform(kb, (hidden_dim,), dtype,
                               minval=-bound, maxval=bound)
        params.append((w, b))
        in_dim = hidden_dim
    key, kw, kb = jax.random.split(key, 3)
    bound = 1.0 / math.sqrt(in_dim)
    w = jax.random.uniform(kw, (in_dim, output_dim), dtype,
                           minval=-bound, maxval=bound)
    b = jax.random.uniform(kb, (output_dim,), dtype,
                           minval=-bound, maxval=bound)
    params.append((w, b))
    return params


def _pack_params(params, d_pad):
    """Stack per-layer (w, b) into zero-padded [L, D, D] bf16 / [L, 1, D] f32."""
    n_layers = len(params)
    w_stack = jnp.zeros((n_layers, d_pad, d_pad), jnp.bfloat16)
    b_stack = jnp.zeros((n_layers, 1, d_pad), jnp.float32)
    for li, (w, b) in enumerate(params):
        w_stack = w_stack.at[li, :w.shape[0], :w.shape[1]].set(
            w.astype(jnp.bfloat16))
        b_stack = b_stack.at[li, 0, :b.shape[0]].set(b.astype(jnp.float32))
    return w_stack, b_stack


def ffnn_forward(x, params):
    """Fused FFNN forward: hidden layers = Linear + exact GELU, final layer =
    plain Linear, dropout = identity (eval mode). Single pallas_call."""
    m, e_dim = x.shape
    n_layers = len(params)
    out_dim = params[-1][0].shape[1]

    # Common padded feature width (lane-dense, multiple of 128).
    all_dims = [e_dim] + [w.shape[1] for (w, _) in params]
    d_pad = _round_up(max(max(all_dims), 128), 128)

    w_stack, b_stack = _pack_params(params, d_pad)

    # Pad + cast the input once (bf16 halves the activation DMA bytes).
    x_pad = jnp.zeros((m, d_pad), jnp.bfloat16).at[:, :e_dim].set(
        x.astype(jnp.bfloat16))

    tm = _pick_row_tile(m)
    assert m % tm == 0
    grid = (m // tm, n_layers)

    out = pl.pallas_call(
        _ffnn_kernel,
        out_shape=jax.ShapeDtypeStruct((m, d_pad), jnp.float32),
        grid_spec=pltpu.PrefetchScalarGridSpec(
            num_scalar_prefetch=0,
            grid=grid,
            in_specs=[
                # input rows: block index constant across the layer axis
                pl.BlockSpec((tm, d_pad), lambda i, l: (i, 0)),
                # per-layer weight (layer dim squeezed out)
                pl.BlockSpec((None, d_pad, d_pad), lambda i, l: (l, 0, 0)),
                # per-layer bias (layer dim squeezed out)
                pl.BlockSpec((None, 1, d_pad), lambda i, l: (l, 0, 0)),
            ],
            out_specs=pl.BlockSpec((tm, d_pad), lambda i, l: (i, 0)),
            scratch_shapes=[pltpu.VMEM((tm, d_pad), jnp.bfloat16)],
        ),
        compiler_params=pltpu.CompilerParams(
            dimension_semantics=("parallel", "arbitrary"),
            vmem_limit_bytes=32 * 1024 * 1024,
        ),
    )(x_pad, w_stack, b_stack)

    return out[:, :out_dim]


def ffnn_reference(x, params):
    """Pure-JAX reference matching the kernel's bf16 quantization of matmul
    inputs / resident activations (accumulation, bias, GELU in f32)."""
    n_layers = len(params)
    h = x.astype(jnp.bfloat16).astype(jnp.float32)
    for li, (w, b) in enumerate(params):
        wq = w.astype(jnp.bfloat16).astype(jnp.float32)
        h = h @ wq + b.astype(jnp.float32)
        if li != n_layers - 1:
            h = 0.5 * h * (1.0 + jax.lax.erf(h * _INV_SQRT2))
            h = h.astype(jnp.bfloat16).astype(jnp.float32)
    return h


if __name__ == "__main__":
    # Small shapes consistent with the module: a batch of token embeddings.
    batch = 16
    embedding_dim = 32
    hidden_dim = 32
    num_hidden_layers = 3
    output_dim = 16

    key = jax.random.PRNGKey(0)
    key, kx = jax.random.split(key)
    x = jax.random.normal(kx, (batch, embedding_dim), jnp.float32)

    params = init_ffnn_params(key, embedding_dim, hidden_dim,
                              num_hidden_layers, output_dim)

    out = ffnn_forward(x, params)
    out = jax.block_until_ready(out)

    ref = ffnn_reference(x, params)
    assert out.shape == (batch, output_dim)
    assert jnp.allclose(out, ref, atol=2e-3, rtol=2e-3), "mismatch vs reference"

    print("KERNEL_OK")
</pallas_src>

<mosaic_0001>
module attributes {stable_mosaic.version = 11 : i64} {
  func.func @_ffnn_kernel(%arg0: i32, %arg1: i32, %arg2: memref<16x128xbf16, #tpu.memory_space<vmem>>, %arg3: memref<1x128x128xbf16, #tpu.memory_space<vmem>>, %arg4: memref<1x1x128xf32, #tpu.memory_space<vmem>>, %arg5: memref<16x128xf32, #tpu.memory_space<vmem>>, %arg6: memref<16x128xbf16, #tpu.memory_space<vmem>>) attributes {dimension_semantics = [#tpu.dimension_semantics<parallel>, #tpu.dimension_semantics<arbitrary>], iteration_bounds = array<i64: 1, 4>, scalar_prefetch = 0 : i64, scratch_operands = 1 : i64, tpu.core_type = #tpu.core_type<tc>, window_params = [{transform_indices = @transform_0, window_bounds = array<i64: 16, 128>}, {transform_indices = @transform_1, window_bounds = array<i64: 1, 128, 128>}, {transform_indices = @transform_2, window_bounds = array<i64: 1, 1, 128>}, {transform_indices = @transform_3, window_bounds = array<i64: 16, 128>}]} {
    %c0_i32 = arith.constant 0 : i32
    %0 = arith.cmpi eq, %arg1, %c0_i32 : i32
    %1 = arith.extui %0 : i1 to i32
    %c0_i32_0 = arith.constant 0 : i32
    %2 = arith.cmpi ne, %1, %c0_i32_0 : i32
    scf.if %2 {
      %c0_11 = arith.constant 0 : index
      %c0_12 = arith.constant 0 : index
      %17 = vector.load %arg2[%c0_11, %c0_12] : memref<16x128xbf16, #tpu.memory_space<vmem>>, vector<16x128xbf16>
      %c0_13 = arith.constant 0 : index
      %c0_14 = arith.constant 0 : index
      %18 = vector.load %arg6[%c0_13, %c0_14] : memref<16x128xbf16, #tpu.memory_space<vmem>>, vector<16x128xbf16>
      tpu.vector_store %arg6[%c0_13, %c0_14], %17 {strides = array<i32>} : memref<16x128xbf16, #tpu.memory_space<vmem>>, vector<16x128xbf16>,
    } else {
    }
    %c0 = arith.constant 0 : index
    %c0_1 = arith.constant 0 : index
    %3 = vector.load %arg6[%c0, %c0_1] : memref<16x128xbf16, #tpu.memory_space<vmem>>, vector<16x128xbf16>
    %c0_2 = arith.constant 0 : index
    %c0_3 = arith.constant 0 : index
    %c0_4 = arith.constant 0 : index
    %4 = vector.load %arg3[%c0_2, %c0_3, %c0_4] : memref<1x128x128xbf16, #tpu.memory_space<vmem>>, vector<1x128x128xbf16>
    %5 = vector.shape_cast %4 : vector<1x128x128xbf16> to vector<128x128xbf16>
    %cst = arith.constant dense<0.000000e+00> : vector<16x128xf32>
    %6 = tpu.matmul %3, %5, %cst {dimension_numbers = #tpu.dot_dimension_numbers<[1], [0], [0], [1], [0, 0, 1, 1], [], []>} : vector<16x128xbf16>, vector<128x128xbf16>, vector<16x128xf32> -> vector<16x128xf32>
    %c0_5 = arith.constant 0 : index
    %c0_6 = arith.constant 0 : index
    %c0_7 = arith.constant 0 : index
    %7 = vector.load %arg4[%c0_5, %c0_6, %c0_7] : memref<1x1x128xf32, #tpu.memory_space<vmem>>, vector<1x1x128xf32>
    %8 = vector.shape_cast %7 : vector<1x1x128xf32> to vector<1x128xf32>
    %9 = vector.broadcast %8 : vector<1x128xf32> to vector<16x128xf32>
    %10 = arith.addf %6, %9 : vector<16x128xf32>
    %c3_i32 = arith.constant 3 : i32
    %11 = arith.cmpi slt, %arg1, %c3_i32 : i32
    %12 = arith.extui %11 : i1 to i32
    %c0_i32_8 = arith.constant 0 : i32
    %13 = arith.cmpi ne, %12, %c0_i32_8 : i32
    scf.if %13 {
      %cst_11 = arith.constant 5.000000e-01 : f32
      %17 = vector.broadcast %cst_11 : f32 to vector<16x128xf32>
      %18 = arith.mulf %17, %10 : vector<16x128xf32>
      %cst_12 = arith.constant 0.707106769 : f32
      %19 = vector.broadcast %cst_12 : f32 to vector<16x128xf32>
      %20 = arith.mulf %10, %19 : vector<16x128xf32>
      %21 = math.erf %20 : vector<16x128xf32>
      %cst_13 = arith.constant 1.000000e+00 : f32
      %22 = vector.broadcast %cst_13 : f32 to vector<16x128xf32>
      %23 = arith.addf %22, %21 : vector<16x128xf32>
      %24 = arith.mulf %18, %23 : vector<16x128xf32>
      %25 = arith.truncf %24 : vector<16x128xf32> to vector<16x128xbf16>
      %c0_14 = arith.constant 0 : index
      %c0_15 = arith.constant 0 : index
      %26 = vector.load %arg6[%c0_14, %c0_15] : memref<16x128xbf16, #tpu.memory_space<vmem>>, vector<16x128xbf16>
      tpu.vector_store %arg6[%c0_14, %c0_15], %25 {strides = array<i32>} : memref<16x128xbf16, #tpu.memory_space<vmem>>, vector<16x128xbf16>,
    } else {
    }
    %c3_i32_9 = arith.constant 3 : i32
    %14 = arith.cmpi eq, %arg1, %c3_i32_9 : i32
    %15 = arith.extui %14 : i1 to i32
    %c0_i32_10 = arith.constant 0 : i32
    %16 = arith.cmpi ne, %15, %c0_i32_10 : i32
    scf.if %16 {
      %c0_11 = arith.constant 0 : index
      %c0_12 = arith.constant 0 : index
      %17 = vector.load %arg5[%c0_11, %c0_12] : memref<16x128xf32, #tpu.memory_space<vmem>>, vector<16x128xf32>
      tpu.vector_store %arg5[%c0_11, %c0_12], %10 {strides = array<i32>} : memref<16x128xf32, #tpu.memory_space<vmem>>, vector<16x128xf32>,
    } else {
    }
    return
  }
  func.func @transform_0(%arg0: i32, %arg1: i32) -> (i32, i32) {
    %c0_i32 = arith.constant 0 : i32
    %c0_i32_0 = arith.constant 0 : i32
    return %arg0, %c0_i32 : i32, i32
  }
  func.func @transform_1(%arg0: i32, %arg1: i32) -> (i32, i32, i32) {
    %c0_i32 = arith.constant 0 : i32
    %c0_i32_0 = arith.constant 0 : i32
    %c0_i32_1 = arith.constant 0 : i32
    return %arg1, %c0_i32, %c0_i32_0 : i32, i32, i32
  }
  func.func @transform_2(%arg0: i32, %arg1: i32) -> (i32, i32, i32) {
    %c0_i32 = arith.constant 0 : i32
    %c0_i32_0 = arith.constant 0 : i32
    %c0_i32_1 = arith.constant 0 : i32
    return %arg1, %c0_i32, %c0_i32_0 : i32, i32, i32
  }
  func.func @transform_3(%arg0: i32, %arg1: i32) -> (i32, i32) {
    %c0_i32 = arith.constant 0 : i32
    %c0_i32_0 = arith.constant 0 : i32
    return %arg0, %c0_i32 : i32, i32
  }
}

</mosaic_0001>

<llo_original>
// kernel: tpu_custom_call.1
$region0: #{tpu_custom_call.1}
  #allocation0 [shape = 'u32[]', space=smem, size = 0x4, offset = 0x4, fixed_abs, tag = 'smem constant byte address 0x4 - core index']
  #allocation1 [shape = 'u32[144,128]{1,0:T(1,128)}', space=vmem, size = 0x12000, scoped, tag = 'internal scratch']
  #allocation2 [shape = 'bf16[16,128]{1,0:T(8,128)(2,1)}', space=vmem, size = 0x1000, scoped, tag = 'scratch operand']
  %s0 = inlined_call_operand.hbm [shape: bf16[16,128], index: 0, kind: input, shape index: {}]
  %s1 = inlined_call_operand.hbm [shape: bf16[4,128,128], index: 1, kind: input, shape index: {}]
  %s2 = inlined_call_operand.hbm [shape: f32[4,1,128], index: 2, kind: input, shape index: {}]
  %s3 = inlined_call_operand.hbm [shape: f32[16,128], index: 3, kind: output, shape index: {}]
  %s4 = sld [smem:[#allocation0]]
  $region69: #{tpu_custom_call.1} parent=0
    _
  %s6 = ssub.s32 1, %s4
  %s7 = scalar_select 0, %s6, %s4
  $region1: #{tpu_custom_call.1} parent=0
    #allocation3 [shape = 'u8[4096]{0}', space=vmem, size = 0x1000, scoped, tag = 'input window, operand 0, single buffered']
    #allocation4 [shape = 's32[2]{0}', space=sflag, size = 0x8, scoped, tag = 'scoped memory for tpu_custom_call.1']
    #allocation5 [shape = 's32[2]{0}', space=sflag, size = 0x8, scoped, tag = 'scoped memory for tpu_custom_call.1']
    #allocation6 [shape = 'u8[65536]{0}', space=vmem, size = 0x10000, scoped, tag = 'input window, operand 1']
    #allocation7 [shape = 's32[2]{0}', space=sflag, size = 0x8, scoped, tag = 'scoped memory for tpu_custom_call.1']
    #allocation8 [shape = 'u8[1024]{0}', space=vmem, size = 0x400, scoped, tag = 'input window, operand 2']
    #allocation9 [shape = 'u8[8192]{0}', space=vmem, size = 0x2000, scoped, tag = 'output window, operand 0, single buffered']
    %8 = vsyncpa [#allocation4], 0
    %9 = vsyncpa [#allocation7], 0
    %s10 = scalar_lea.sflag [#allocation7], 1
    %11 = vsyncpa %s10, 0
    %12 = vsyncpa [#allocation5], 0
    loop: start=0, step=1, limit=6
    $region2: #{tpu_custom_call.1} parent=1 // loop_pre_header
      _
    $region3: #{tpu_custom_call.1} parent=1 // loop_header
      %s14 = sphi 0, %s18
      %p15 = scmp.ge.s32.totalorder %s14, 6
      %s21 = sphi 0, %s33
      %s22 = sphi 0, %s29
      %s23 = sphi 0, %s21
      %s24 = sphi 0, %s22
      %s25 = sphi 0, %s23
      %s26 = sphi 0, %s24
      %s36 = sphi 0, %s38
      %s39 = sphi 0, %s36
      %s40 = sphi 0, %s39
      %s56 = sphi 0, %s40
      %s62 = sphi 0, %s64
      %s65 = sphi 0, %s62
      %s66 = sphi 0, %s65
      %s82 = sphi 0, %s66
      %s88 = sphi 0, %s90
      %s91 = sphi 0, %s88
      %s92 = sphi 0, %s91
      %s108 = sphi 0, %s92
      %s114 = sphi 0, %s116
      %s117 = sphi 0, %s114
      %s118 = sphi 0, %s117
      %s134 = sphi 0, %s118
    $region4: #{tpu_custom_call.1} parent=1 // loop_header_branch
      %17 = sbr.rel (%p15) target = $region8
    $region5: #{tpu_custom_call.1} parent=1 // loop_body
      %s19 = ssub.s32 %s14, 1
      %s20 = ssub.s32 %s14, 2
      %s27 = sadd.s32 1, %s22
      %p28 = scmp.ge.s32.totalorder %s27, 4
      %s29 = scalar_select %p28, 0, %s27
      %s30 = sadd.s32 1, %s21
      %s31 = scalar_select %p28, %s30, %s21
      %p32 = scmp.ge.s32.totalorder %s31, 1
      %s33 = scalar_select %p32, 0, %s31
      %s34 = ssub.s32 %s21, %s33
      %p35 = scmp.eq.s32.totalorder %s34, 0
      %s37 = sadd.s32 %s36, 1
      %s38 = scalar_select %p35, %s36, %s37
      %p41 = pneg %p35
      %p42 = scmp.eq.s32.totalorder %s14, 3
      %p43 = por %p41, %p42
      %p44 = scmp.ne.s32.totalorder %s36, %s39
      %p45 = scmp.eq.s32.totalorder %s14, 0
      %p46 = por %p44, %p45
      %p47 = scmp.ne.s32.totalorder %s36, %s39
      %p48 = scmp.eq.s32.totalorder %s19, 3
      %p49 = por %p47, %p48
      %p50 = scmp.ne.s32.totalorder %s39, %s40
      %p51 = scmp.eq.s32.totalorder %s19, 0
      %p52 = por %p50, %p51
      %p53 = scmp.ne.s32.totalorder %s39, %s40
      %p54 = scmp.eq.s32.totalorder %s20, 3
      %p55 = por %p53, %p54
      %p57 = scmp.ne.s32.totalorder %s40, %s56
      %p58 = scmp.eq.s32.totalorder %s20, 0
      %p59 = por %p57, %p58
      %s60 = ssub.s32 %s22, %s29
      %p61 = scmp.eq.s32.totalorder %s60, 0
      %s63 = sadd.s32 %s62, 1
      %s64 = scalar_select %p61, %s62, %s63
      %p67 = pneg %p61
      %p68 = scmp.eq.s32.totalorder %s14, 3
      %p69 = por %p67, %p68
      %p70 = scmp.ne.s32.totalorder %s62, %s65
      %p71 = scmp.eq.s32.totalorder %s14, 0
      %p72 = por %p70, %p71
      %p73 = scmp.ne.s32.totalorder %s62, %s65
      %p74 = scmp.eq.s32.totalorder %s19, 3
      %p75 = por %p73, %p74
      %p76 = scmp.ne.s32.totalorder %s65, %s66
      %p77 = scmp.eq.s32.totalorder %s19, 0
      %p78 = por %p76, %p77
      %p79 = scmp.ne.s32.totalorder %s65, %s66
      %p80 = scmp.eq.s32.totalorder %s20, 3
      %p81 = por %p79, %p80
      %p83 = scmp.ne.s32.totalorder %s66, %s82
      %p84 = scmp.eq.s32.totalorder %s20, 0
      %p85 = por %p83, %p84
      %s86 = ssub.s32 %s22, %s29
      %p87 = scmp.eq.s32.totalorder %s86, 0
      %s89 = sadd.s32 %s88, 1
      %s90 = scalar_select %p87, %s88, %s89
      %p93 = pneg %p87
      %p94 = scmp.eq.s32.totalorder %s14, 3
      %p95 = por %p93, %p94
      %p96 = scmp.ne.s32.totalorder %s88, %s91
      %p97 = scmp.eq.s32.totalorder %s14, 0
      %p98 = por %p96, %p97
      %p99 = scmp.ne.s32.totalorder %s88, %s91
      %p100 = scmp.eq.s32.totalorder %s19, 3
      %p101 = por %p99, %p100
      %p102 = scmp.ne.s32.totalorder %s91, %s92
      %p103 = scmp.eq.s32.totalorder %s19, 0
      %p104 = por %p102, %p103
      %p105 = scmp.ne.s32.totalorder %s91, %s92
      %p106 = scmp.eq.s32.totalorder %s20, 3
      %p107 = por %p105, %p106
      %p109 = scmp.ne.s32.totalorder %s92, %s108
      %p110 = scmp.eq.s32.totalorder %s20, 0
      %p111 = por %p109, %p110
      %s112 = ssub.s32 %s21, %s33
      %p113 = scmp.eq.s32.totalorder %s112, 0
      %s115 = sadd.s32 %s114, 1
      %s116 = scalar_select %p113, %s114, %s115
      %p119 = pneg %p113
      %p120 = scmp.eq.s32.totalorder %s14, 3
      %p121 = por %p119, %p120
      %p122 = scmp.ne.s32.totalorder %s114, %s117
      %p123 = scmp.eq.s32.totalorder %s14, 0
      %p124 = por %p122, %p123
      %p125 = scmp.ne.s32.totalorder %s114, %s117
      %p126 = scmp.eq.s32.totalorder %s19, 3
      %p127 = por %p125, %p126
      %p128 = scmp.ne.s32.totalorder %s117, %s118
      %p129 = scmp.eq.s32.totalorder %s19, 0
      %p130 = por %p128, %p129
      %p131 = scmp.ne.s32.totalorder %s117, %s118
      %p132 = scmp.eq.s32.totalorder %s20, 3
      %p133 = por %p131, %p132
      %p135 = scmp.ne.s32.totalorder %s118, %s134
      %p136 = scmp.eq.s32.totalorder %s20, 0
      %p137 = por %p135, %p136
      %p138 = scmp.le.s32.totalorder 1, %s14
      %p139 = scmp.lt.s32.totalorder %s14, 5
      %p140 = pnand %p138, %p139
      %p141 = pneg %p140
      // Predicated region
      $region9: #{tpu_custom_call.1} parent=5 // pred_check
        _
      $region10: #{tpu_custom_call.1} parent=5 // pred_check_branch
        %143 = sbr.rel (%p140) target = $region12
      $region11: #{tpu_custom_call.1} parent=5 // pred_region
        %s144 = ssub.s32 %s14, 1
        // Predicated region
        $region13: #{tpu_custom_call.1} parent=11 // pred_check
          %p145 = pneg %p52
        $region14: #{tpu_custom_call.1} parent=11 // pred_check_branch
          %147 = sbr.rel (%p145) target = $region16
        $region15: #{tpu_custom_call.1} parent=11 // pred_region
          %s148 = smul.u32 2, %s23
          %s150 = ssub.s32 128, 128
          %151 = vsyncadd [#allocation4], %s150
          %s152 = smul.addr %s148, 64
          %s153 = scalar_lea.hbm %s0, %s152
          %s154 = sshll.u32 [#allocation3], 4
          %s155 = int_to_ptr.vmem [resolvable:$true] %s154
          %160 = dma.hbm_to_vmem [thread:$0]  %s153, 128, %s155, [#allocation4], 64, 64, 4
        $region16: #{tpu_custom_call.1} parent=11 // pred_fallthru
          _
      $region12: #{tpu_custom_call.1} parent=5 // pred_fallthru
        _
      %p161 = scmp.lt.s32.totalorder %s14, 4
      // Predicated region
      $region17: #{tpu_custom_call.1} parent=5 // pred_check
        %p162 = pneg %p161
      $region18: #{tpu_custom_call.1} parent=5 // pred_check_branch
        %164 = sbr.rel (%p162) target = $region20
      $region19: #{tpu_custom_call.1} parent=5 // pred_region
        // Predicated region
        $region21: #{tpu_custom_call.1} parent=19 // pred_check
          %p165 = pneg %p72
        $region22: #{tpu_custom_call.1} parent=19 // pred_check_branch
          %167 = sbr.rel (%p165) target = $region24
        $region23: #{tpu_custom_call.1} parent=19 // pred_region
          %s168 = sand.u32 %s14, 1
          %s169 = scalar_lea.sflag [#allocation7], %s168
          %s170 = sand.u32 %s62, 1
          %s171 = smul.addr %s170, 64
          %s172 = scalar_lea.vmem [#allocation6], %s171
          %s174 = ssub.s32 1024, 1024
          %175 = vsyncadd %s169, %s174
          %s176 = smul.addr %s22, 16
          %s177 = smul.addr %s176, 64
          %s178 = scalar_lea.hbm %s1, %s177
          %s179 = sshll.u32 %s172, 4
          %s180 = int_to_ptr.vmem [resolvable:$true] %s179
          %185 = dma.hbm_to_vmem [thread:$0]  %s178, 1024, %s180, %s169, 64, 64, 4
        $region24: #{tpu_custom_call.1} parent=19 // pred_fallthru
          _
        // Predicated region
        $region25: #{tpu_custom_call.1} parent=19 // pred_check
          %p186 = pneg %p98
        $region26: #{tpu_custom_call.1} parent=19 // pred_check_branch
          %188 = sbr.rel (%p186) target = $region28
        $region27: #{tpu_custom_call.1} parent=19 // pred_region
          %s189 = sand.u32 %s14, 1
          %s190 = scalar_lea.sflag [#allocation7], %s189
          %s191 = sand.u32 %s88, 1
          %s192 = scalar_lea.vmem [#allocation8], %s191
          %s194 = ssub.s32 16, 16
          %195 = vsyncadd %s190, %s194
          %s196 = smul.addr %s22, 16
          %s197 = scalar_lea.hbm %s2, %s196
          %s199 = sshll.u32 %s192, 4
          %s200 = int_to_ptr.vmem [resolvable:$true] %s199
          %202 = dma.hbm_to_vmem [thread:$0]  %s197, 16, %s200, %s190
        $region28: #{tpu_custom_call.1} parent=19 // pred_fallthru
          _
      $region20: #{tpu_custom_call.1} parent=5 // pred_fallthru
        _
      %p203 = scmp.le.s32.totalorder 1, %s14
      %p204 = scmp.lt.s32.totalorder %s14, 5
      %p205 = pnand %p203, %p204
      %p206 = pneg %p205
      // Predicated region
      $region29: #{tpu_custom_call.1} parent=5 // pred_check
        _
      $region30: #{tpu_custom_call.1} parent=5 // pred_check_branch
        %208 = sbr.rel (%p205) target = $region32
      $region31: #{tpu_custom_call.1} parent=5 // pred_region
        %s209 = ssub.s32 %s14, 1
        // Predicated region
        $region33: #{tpu_custom_call.1} parent=31 // pred_check
          %p210 = pneg %p52
        $region34: #{tpu_custom_call.1} parent=31 // pred_check_branch
          %212 = sbr.rel (%p210) target = $region36
        $region35: #{tpu_custom_call.1} parent=31 // pred_region
          %213 = dma.done [#allocation4], 128
        $region36: #{tpu_custom_call.1} parent=31 // pred_fallthru
          _
        %s214 = sand.u32 %s19, 1
        %s215 = scalar_lea.sflag [#allocation7], %s214
        %s216 = sand.u32 %s65, 1
        %s217 = smul.addr %s216, 64
        %s218 = scalar_lea.vmem [#allocation6], %s217
        // Predicated region
        $region37: #{tpu_custom_call.1} parent=31 // pred_check
          %p219 = pneg %p78
        $region38: #{tpu_custom_call.1} parent=31 // pred_check_branch
          %221 = sbr.rel (%p219) target = $region40
        $region39: #{tpu_custom_call.1} parent=31 // pred_region
          %222 = dma.done %s215, 1024
        $region40: #{tpu_custom_call.1} parent=31 // pred_fallthru
          _
        %s223 = sand.u32 %s19, 1
        %s224 = scalar_lea.sflag [#allocation7], %s223
        %s225 = sand.u32 %s91, 1
        %s226 = scalar_lea.vmem [#allocation8], %s225
        // Predicated region
        $region41: #{tpu_custom_call.1} parent=31 // pred_check
          %p227 = pneg %p104
        $region42: #{tpu_custom_call.1} parent=31 // pred_check_branch
          %229 = sbr.rel (%p227) target = $region44
        $region43: #{tpu_custom_call.1} parent=31 // pred_region
          %230 = dma.done %s224, 16
        $region44: #{tpu_custom_call.1} parent=31 // pred_fallthru
          _
        %p231 = pneg %p52
        %p232 = pneg %p49
        %s233 = sand.u32 %s19, 1
        %s234 = scalar_lea.sflag [#allocation7], %s233
        %s235 = sand.u32 %s65, 1
        %s236 = smul.addr %s235, 64
        %s237 = scalar_lea.vmem [#allocation6], %s236
        %p238 = pneg %p78
        %p239 = pneg %p75
        %s240 = sand.u32 %s19, 1
        %s241 = scalar_lea.sflag [#allocation7], %s240
        %s242 = sand.u32 %s91, 1
        %s243 = scalar_lea.vmem [#allocation8], %s242
        %p244 = pneg %p104
        %p245 = pneg %p101
        %p246 = pneg %p130
        %p247 = pneg %p127
        %s248 = smul.u32 2, %s23
        %s249 = smul.u32 2, %s23
        %p251 = scmp.eq.s32.totalorder %s24, 0
        // Predicated region
        $region45: #{tpu_custom_call.1} parent=31 // pred_check
          %p252 = pneg %p251
        $region46: #{tpu_custom_call.1} parent=31 // pred_check_branch
          %254 = sbr.rel (%p252) target = $region48
        $region47: #{tpu_custom_call.1} parent=31 // pred_region
          %v255 = vld [vmem:[#allocation3] sm:$0xf]
          %v256 = vld [vmem:[#allocation3 + $0x4] sm:$0xf]
          %257 = vst [vmem:[#allocation2] sm:$0xf] %v255
          %258 = vst [vmem:[#allocation2 + $0x4] sm:$0xf] %v256
        $region48: #{tpu_custom_call.1} parent=31 // pred_fallthru
          _
        %v259 = vld [vmem:[#allocation2] sm:$0xf]
        %v260 = vld [vmem:[#allocation2 + $0x4] sm:$0xf]
        %v261 = vld [vmem:[%s218] sm:$0xf]
        %v262 = vld [vmem:[%s218 + $0x4] sm:$0xf]
        %v263 = vld [vmem:[%s218 + $0x8] sm:$0xf]
        %v264 = vld [vmem:[%s218 + $0xc] sm:$0xf]
        %v265 = vld [vmem:[%s218 + $0x10] sm:$0xf]
        %v266 = vld [vmem:[%s218 + $0x14] sm:$0xf]
        %v267 = vld [vmem:[%s218 + $0x18] sm:$0xf]
        %v268 = vld [vmem:[%s218 + $0x1c] sm:$0xf]
        %v269 = vld [vmem:[%s218 + $0x20] sm:$0xf]
        %v270 = vld [vmem:[%s218 + $0x24] sm:$0xf]
        %v271 = vld [vmem:[%s218 + $0x28] sm:$0xf]
        %v272 = vld [vmem:[%s218 + $0x2c] sm:$0xf]
        %v273 = vld [vmem:[%s218 + $0x30] sm:$0xf]
        %v274 = vld [vmem:[%s218 + $0x34] sm:$0xf]
        %v275 = vld [vmem:[%s218 + $0x38] sm:$0xf]
        %v276 = vld [vmem:[%s218 + $0x3c] sm:$0xf]
        %v277 = vld [vmem:[%s226] sm:$0x1]
        %v279 = vlaneseq
        %v280 = vshrl.u32 %v279, 7
        %v281 = vsub.s32 0, %v280
        %v282 = vrot.slane %v277, %v281
        %v286 = vunpack.c.l.b16 %v259
        %v287 = vunpack.c.l.b16 %v260
        %v288 = vpack.c.b16 %v287, %v286
        %v306 = vunpack.c.l.b16 %v261
        %v307 = vunpack.c.l.b16 %v262
        %v308 = vunpack.c.l.b16 %v263
        %v309 = vunpack.c.l.b16 %v264
        %v310 = vunpack.c.l.b16 %v265
        %v311 = vunpack.c.l.b16 %v266
        %v312 = vunpack.c.l.b16 %v267
        %v313 = vunpack.c.l.b16 %v268
        %v314 = vunpack.c.l.b16 %v269
        %v315 = vunpack.c.l.b16 %v270
        %v316 = vunpack.c.l.b16 %v271
        %v317 = vunpack.c.l.b16 %v272
        %v318 = vunpack.c.l.b16 %v273
        %v319 = vunpack.c.l.b16 %v274
        %v320 = vunpack.c.l.b16 %v275
        %v321 = vunpack.c.l.b16 %v276
        %v322 = vpack.c.b16 %v307, %v306
        %v323 = vpack.c.b16 %v309, %v308
        %v324 = vpack.c.b16 %v311, %v310
        %v325 = vpack.c.b16 %v313, %v312
        %v326 = vpack.c.b16 %v315, %v314
        %v327 = vpack.c.b16 %v317, %v316
        %v328 = vpack.c.b16 %v319, %v318
        %v329 = vpack.c.b16 %v321, %v320
        %338 = vmatprep.subr.bf16.mxu0 0
        %339 = vmatpush1.bf16.msra.mxu0 %v329
        %340 = vmatprep.subr.bf16.mxu0 0
        %341 = vmatpush1.bf16.msra.mxu0 %v328
        %342 = vmatprep.subr.bf16.mxu0 0
        %343 = vmatpush1.bf16.msra.mxu0 %v327
        %344 = vmatprep.subr.bf16.mxu0 0
        %345 = vmatpush1.bf16.msra.mxu0 %v326
        %346 = vmatprep.subr.bf16.mxu0 0
        %347 = vmatpush1.bf16.msra.mxu0 %v325
        %348 = vmatprep.subr.bf16.mxu0 0
        %349 = vmatpush1.bf16.msra.mxu0 %v324
        %350 = vmatprep.subr.bf16.mxu0 0
        %351 = vmatpush1.bf16.msra.mxu0 %v323
        %352 = vmatprep.subr.bf16.mxu0 0
        %353 = vmatpush1.bf16.msra.mxu0 %v322
        %354 = vmatprep.subr.bf16.mxu0 0
        %355 = vmatpush2.bf16.msra.mxu0 0
        %356 = vmatprep.subr.bf16.mxu0 0
        %357 = vmatpush2.bf16.msra.mxu0 0
        %358 = vmatprep.subr.bf16.mxu0 0
        %359 = vmatpush2.bf16.msra.mxu0 0
        %360 = vmatprep.subr.bf16.mxu0 0
        %361 = vmatpush2.bf16.msra.mxu0 0
        %362 = vmatprep.subr.bf16.mxu0 0
        %363 = vmatpush2.bf16.msra.mxu0 0
        %364 = vmatprep.subr.bf16.mxu0 0
        %365 = vmatpush2.bf16.msra.mxu0 0
        %366 = vmatprep.subr.bf16.mxu0 0
        %367 = vmatpush2.bf16.msra.mxu0 0
        %368 = vmatprep.subr.bf16.mxu0 0
        %369 = vmatpush2.bf16.msra.mxu0 0
        %370 = vmatprep.mubr.bf16.mxu0 0
        %371 = vmatmul.mubr.bf16.gmra.mxu0 %v288
        %v372 = vpop.f32.mrf.mxu0
        %v373 = vadd.f32 %v282, %v372
        %v374 = vpop.f32.mrf.mxu0
        %v375 = vpop.f32.mrf.mxu0
        %v376 = vadd.f32 %v282, %v375
        %v377 = vpop.f32.mrf.mxu0
        %378 = vdwg.mxu0
        %p379 = scmp.lt.s32.totalorder %s24, 3
        // Predicated region
        $region49: #{tpu_custom_call.1} parent=31 // pred_check
          %p380 = pneg %p379
        $region50: #{tpu_custom_call.1} parent=31 // pred_check_branch
          %382 = sbr.rel (%p380) target = $region52
        $region51: #{tpu_custom_call.1} parent=31 // pred_region
          %v383 = vmul.f32 %v373, 0.5
          %v384 = vmul.f32 %v376, 0.5
          %v385 = vmul.f32 %v373, 0.70710677
          %v386 = vmul.f32 %v376, 0.70710677
          %v387 = verf.f32.pop %v385
          %v388 = verf.f32.pop %v386
          %v389 = vadd.f32 %v387, 1.0
          %v390 = vadd.f32 %v388, 1.0
          %v391 = vmul.f32 %v383, %v389
          %v392 = vmul.f32 %v384, %v390
          %v393 = vpack.c.bf16 %v392, %v391
          %v395 = vunpack.c.l.b16 %v393
          %v396 = vunpack.c.h.b16 %v393
          %v397 = vpack.c.b16 %v395, %v395
          %v398 = vpack.c.b16 %v396, %v396
          %401 = vst [vmem:[#allocation2] sm:$0xf] %v397
          %402 = vst [vmem:[#allocation2 + $0x4] sm:$0xf] %v398
        $region52: #{tpu_custom_call.1} parent=31 // pred_fallthru
          _
        %p403 = scmp.eq.s32.totalorder %s24, 3
        // Predicated region
        $region53: #{tpu_custom_call.1} parent=31 // pred_check
          %p404 = pneg %p403
        $region54: #{tpu_custom_call.1} parent=31 // pred_check_branch
          %406 = sbr.rel (%p404) target = $region56
        $region55: #{tpu_custom_call.1} parent=31 // pred_region
          %407 = vst [vmem:[#allocation9] sm:$0xff] %v373
          %408 = vst [vmem:[#allocation9 + $0x8] sm:$0xff] %v376
        $region56: #{tpu_custom_call.1} parent=31 // pred_fallthru
          _
        // Predicated region
        $region57: #{tpu_custom_call.1} parent=31 // pred_check
          %p409 = pneg %p127
        $region58: #{tpu_custom_call.1} parent=31 // pred_check_branch
          %411 = sbr.rel (%p409) target = $region60
        $region59: #{tpu_custom_call.1} parent=31 // pred_region
          %s412 = smul.u32 2, %s23
          %s414 = ssub.s32 256, 256
          %415 = vsyncadd [#allocation5], %s414
          %s416 = smul.addr %s412, 128
          %s417 = scalar_lea.hbm %s3, %s416
          %s418 = sshll.u32 [#allocation9], 4
          %s419 = int_to_ptr.vmem [resolvable:$true] %s418
          %424 = dma.vmem_to_hbm [thread:$0]  %s419, 256, %s417, [#allocation5], 128, 128, 8
        $region60: #{tpu_custom_call.1} parent=31 // pred_fallthru
          _
        // Predicated region
        $region61: #{tpu_custom_call.1} parent=31 // pred_check
          %p425 = pneg %p127
        $region62: #{tpu_custom_call.1} parent=31 // pred_check_branch
          %427 = sbr.rel (%p425) target = $region64
        $region63: #{tpu_custom_call.1} parent=31 // pred_region
          %428 = dma.done [#allocation5], 256
        $region64: #{tpu_custom_call.1} parent=31 // pred_fallthru
          _
      $region32: #{tpu_custom_call.1} parent=5 // pred_fallthru
        _
      %p429 = scmp.le.s32.totalorder 2, %s14
      // Predicated region
      $region65: #{tpu_custom_call.1} parent=5 // pred_check
        %p430 = pneg %p429
      $region66: #{tpu_custom_call.1} parent=5 // pred_check_branch
        %432 = sbr.rel (%p430) target = $region68
      $region67: #{tpu_custom_call.1} parent=5 // pred_region
        %s433 = ssub.s32 %s14, 2
      $region68: #{tpu_custom_call.1} parent=5 // pred_fallthru
        _
    $region6: #{tpu_custom_call.1} parent=1 // loop_footer
      %s18 = sadd.s32 1, %s14
    $region7: #{tpu_custom_call.1} parent=1 // loop_footer_branch
      %13 = sbr.rel target = $region3
    $region8: #{tpu_custom_call.1} parent=1 // loop_exit
      _
    %434 = vsyncpa [#allocation4], 1
    %s435 = scalar_lea.sflag [#allocation4], 1
    %436 = vsyncpa %s435, 1
    %437 = vsyncpa [#allocation7], 1
    %s438 = scalar_lea.sflag [#allocation7], 1
    %439 = vsyncpa %s438, 1
    %440 = vsyncpa [#allocation5], 1
    %s441 = scalar_lea.sflag [#allocation5], 1
    %442 = vsyncpa %s441, 1

</llo_original>
